<compile_context>
chip_gen: v7x
topology: tpu7x:2x2x1
jax: 0.10.0
libtpu: 0.0.40
codegen_flags: <defaults>
</compile_context>

<pallas_src>
import jax
import jax.numpy as jnp
from jax import lax
from jax.experimental import pallas as pl
from jax.experimental.pallas import tpu as pltpu


def _round_up(v, m):
    return ((v + m - 1) // m) * m


def _tpu_caps():
    """Returns (vmem_capacity_bytes, likely_two_tensorcores_per_chip)."""
    try:
        vmem = int(pltpu.get_tpu_info().vmem_capacity_bytes)
    except Exception:
        vmem = 128 * 1024 * 1024
    # v7x exposes 64 MiB VMEM per TensorCore and has 2 TCs/chip; v5e/v6e are
    # 128 MiB / 1 TC.  Use VMEM size as a robust generation proxy.
    return vmem, vmem <= 64 * 1024 * 1024


def _self_output_kernel(x_ref, res_ref, w_ref, p_ref, o_ref):
    # x_ref:   (TM, H) tile of hidden_states (native dtype, e.g. bf16)
    # res_ref: (TM, H) tile of input_tensor (residual)
    # w_ref:   (H, H)  dense weight, pre-transposed to [in, out], resident
    # p_ref:   (3, H)  f32 packed params: row0 = dense bias, row1 = LN gamma, row2 = LN beta
    # o_ref:   (TM, H) output tile
    #
    # NOTE: the last grid step may be a ragged (partial) tile.  OOB rows hold
    # arbitrary data; all math below is strictly row-wise (matmul over H,
    # LayerNorm over H), so garbage rows never contaminate valid rows and are
    # masked on store.  Do NOT add cross-row reductions here.

    # Dense on the MXU: native-dtype inputs, f32 accumulation (no per-step casts).
    h = jnp.dot(x_ref[...], w_ref[...], preferred_element_type=jnp.float32)
    h = h + p_ref[0:1, :]                       # dense bias (already f32)

    # Residual add. TODO(synk): dropout omitted — identity in eval/inference mode.
    h = h + res_ref[...].astype(jnp.float32)

    # BertLayerNorm (TF style: eps inside sqrt, biased variance over last dim).
    u = jnp.mean(h, axis=-1, keepdims=True)
    d = h - u
    s = jnp.mean(d * d, axis=-1, keepdims=True)
    inv = lax.rsqrt(s + 1e-12)                  # (TM,1) rsqrt on EUP (few-ULP vs 1/sqrt)
    out = p_ref[1:2, :] * (d * inv) + p_ref[2:3, :]

    o_ref[...] = out.astype(o_ref.dtype)


def bert_self_output(hidden_states, input_tensor, w_io, b, gamma, beta, *, tm=512):
    """Fused BertSelfOutput forward.

    hidden_states, input_tensor: [tokens, H].  bf16 recommended — the kernel is
        HBM-bound on v6e/v7x; cast once at load time, not per call.
    w_io:  dense weight pre-transposed to [in, out] (once, at load time).
    b, gamma, beta: [H].
    tm:    token tile.  512 is a good default on v6e/v7x; sweep 256-512 on v5e.
    """
    M, H = hidden_states.shape
    assert input_tensor.shape == (M, H)
    assert w_io.shape == (H, H)

    act_bytes = jnp.dtype(hidden_states.dtype).itemsize
    w_bytes = jnp.dtype(w_io.dtype).itemsize

    vmem_cap, two_cores = _tpu_caps()
    budget = int(0.8 * vmem_cap)                # ~51 MiB on v7x, ~102 MiB on v5e/v6e

    # Effective token tile: multiple of 8, no larger than the (rounded) token
    # count.  No wrapper-side padding — grid = cdiv(M, tm_eff); ragged final
    # block is handled by Pallas with masked stores.
    tm_eff = min(tm, _round_up(M, 8))
    if two_cores:
        # v7x: make sure the grid has >= 2 steps so ("parallel",) feeds both TCs.
        tm_eff = min(tm_eff, _round_up(-(-M // 2), 8))
    tm_eff = max(8, tm_eff)

    def _tile_bytes(t):
        return (2 * 2 * t * H * act_bytes       # x + residual, double-buffered
                + 2 * t * H * act_bytes         # output, double-buffered
                + 2 * H * H * w_bytes           # weight (worst-case 2 buffers)
                + 2 * 8 * H * 4                 # packed params (sublane-padded)
                + 4 * t * H * 4)                # f32 intermediates headroom

    while tm_eff > 8 and _tile_bytes(tm_eff) > budget:
        tm_eff = max(8, _round_up(tm_eff // 2, 8))

    vmem_limit = int(min(budget, max(2 * _tile_bytes(tm_eff), 32 * 1024 * 1024)))

    # Pack bias / gamma / beta once into a single f32 operand (tiny).
    params = jnp.stack([b, gamma, beta]).astype(jnp.float32)     # (3, H)

    grid_m = pl.cdiv(M, tm_eff)
    cost = pl.CostEstimate(
        flops=2 * M * H * H,
        transcendentals=M,                      # one rsqrt per row
        bytes_accessed=3 * M * H * act_bytes + H * H * w_bytes + 3 * H * 4,
    )

    def _make_call(weight_pipeline_mode):
        if weight_pipeline_mode is None:
            w_spec = pl.BlockSpec((H, H), lambda i: (0, 0))
        else:
            w_spec = pl.BlockSpec((H, H), lambda i: (0, 0),
                                  pipeline_mode=weight_pipeline_mode)
        return pl.pallas_call(
            _self_output_kernel,
            out_shape=jax.ShapeDtypeStruct((M, H), hidden_states.dtype),
            grid_spec=pltpu.PrefetchScalarGridSpec(
                num_scalar_prefetch=0,
                grid=(grid_m,),
                in_specs=[
                    pl.BlockSpec((tm_eff, H), lambda i: (i, 0)),   # hidden_states tile
                    pl.BlockSpec((tm_eff, H), lambda i: (i, 0)),   # residual tile
                    w_spec,                                        # weight (resident)
                    pl.BlockSpec((3, H), lambda i: (0, 0)),        # bias/gamma/beta
                ],
                out_specs=pl.BlockSpec((tm_eff, H), lambda i: (i, 0)),
            ),
            compiler_params=pltpu.CompilerParams(
                dimension_semantics=("parallel",),
                vmem_limit_bytes=vmem_limit,
            ),
            cost_estimate=cost,
        )

    try:
        # Resident weight: single-buffer (constant index_map -> never re-fetched).
        return _make_call(pl.Buffered(1))(hidden_states, input_tensor, w_io, params)
    except Exception:
        # Fallback if this Pallas build rejects Buffered(1) on an input spec.
        return _make_call(None)(hidden_states, input_tensor, w_io, params)


def _reference(x, res, w, b, gamma, beta):
    # w is the PyTorch-layout [out, in] weight.
    h = x @ w.T + b
    h = h + res
    u = h.mean(-1, keepdims=True)
    s = ((h - u) ** 2).mean(-1, keepdims=True)
    h = (h - u) / jnp.sqrt(s + 1e-12)
    return gamma * h + beta


if __name__ == "__main__":
    # Small shapes consistent with the module: batch=2, seq=8, hidden=32.
    batch, seq, hidden = 2, 8, 32
    key = jax.random.PRNGKey(0)
    kx, kr, kw, kb, kg, kbe = jax.random.split(key, 6)

    hidden_states = jax.random.normal(kx, (batch, seq, hidden), dtype=jnp.float32)
    input_tensor = jax.random.normal(kr, (batch, seq, hidden), dtype=jnp.float32)

    # Deterministic synthetic parameters (nn.Linear(H, H) + BertLayerNorm(H)).
    w = jax.random.normal(kw, (hidden, hidden), dtype=jnp.float32) * 0.02   # [out, in]
    b = jax.random.normal(kb, (hidden,), dtype=jnp.float32) * 0.02
    gamma = jnp.ones((hidden,), dtype=jnp.float32) + 0.01 * jax.random.normal(kg, (hidden,))
    beta = 0.01 * jax.random.normal(kbe, (hidden,), dtype=jnp.float32)

    # One-time weight-layout conversion ([out,in] -> [in,out]); done at load
    # time, NOT per call.
    w_io_f32 = jnp.asarray(w.T)

    x2d = hidden_states.reshape(batch * seq, hidden)
    r2d = input_tensor.reshape(batch * seq, hidden)

    # --- f32 path: tight check (rsqrt vs divide-by-sqrt is a few ULPs) -------
    out_f32 = bert_self_output(x2d, r2d, w_io_f32, b, gamma, beta, tm=512)
    jax.block_until_ready(out_f32)
    ref_f32 = _reference(x2d, r2d, w, b, gamma, beta)
    assert jnp.allclose(out_f32, ref_f32, atol=1e-4, rtol=1e-4), "f32 mismatch"

    # --- ragged-M path (M not a multiple of the tile): no pad / no slice -----
    Mr = 13
    out_rag = bert_self_output(x2d[:Mr], r2d[:Mr], w_io_f32, b, gamma, beta, tm=512)
    jax.block_until_ready(out_rag)
    assert out_rag.shape == (Mr, hidden)
    assert jnp.allclose(out_rag, ref_f32[:Mr], atol=1e-4, rtol=1e-4), "ragged mismatch"

    # --- bf16 path: recommended deployment dtype (HBM-bound on v6e/v7x) ------
    x_bf, r_bf = x2d.astype(jnp.bfloat16), r2d.astype(jnp.bfloat16)
    w_bf = w_io_f32.astype(jnp.bfloat16)          # cast once at load time
    out_bf = bert_self_output(x_bf, r_bf, w_bf, b, gamma, beta, tm=512)
    jax.block_until_ready(out_bf)
    ref_bf = _reference(x_bf.astype(jnp.float32), r_bf.astype(jnp.float32),
                        w_bf.astype(jnp.float32).T, b, gamma, beta)
    assert jnp.allclose(out_bf.astype(jnp.float32), ref_bf,
                        atol=5e-2, rtol=5e-2), "bf16 mismatch"

    out3d = out_f32.reshape(batch, seq, hidden)   # [B, S, H] like the PyTorch module
    jax.block_until_ready(out3d)
    print("KERNEL_OK")
</pallas_src>

<mosaic_0001>
module attributes {stable_mosaic.version = 11 : i64} {
  func.func @_self_output_kernel(%arg0: i32, %arg1: memref<16x32xf32, #tpu.memory_space<vmem>>, %arg2: memref<16x32xf32, #tpu.memory_space<vmem>>, %arg3: memref<32x32xf32, #tpu.memory_space<vmem>>, %arg4: memref<3x32xf32, #tpu.memory_space<vmem>>, %arg5: memref<16x32xf32, #tpu.memory_space<vmem>>) attributes {dimension_semantics = [#tpu.dimension_semantics<parallel>], iteration_bounds = array<i64: 1>, scalar_prefetch = 0 : i64, scratch_operands = 0 : i64, tpu.core_type = #tpu.core_type<tc>, window_params = [{transform_indices = @transform_0, window_bounds = array<i64: 16, 32>}, {transform_indices = @transform_1, window_bounds = array<i64: 16, 32>}, {pipeline_mode = #tpu.pipeline_mode<synchronous>, transform_indices = @transform_2, window_bounds = array<i64: 32, 32>}, {pipeline_mode = #tpu.pipeline_mode<synchronous>, transform_indices = @transform_3, window_bounds = array<i64: 3, 32>}, {transform_indices = @transform_4, window_bounds = array<i64: 16, 32>}]} {
    %c0 = arith.constant 0 : index
    %c0_0 = arith.constant 0 : index
    %0 = vector.load %arg1[%c0, %c0_0] : memref<16x32xf32, #tpu.memory_space<vmem>>, vector<16x32xf32>
    %c0_1 = arith.constant 0 : index
    %c0_2 = arith.constant 0 : index
    %1 = vector.load %arg3[%c0_1, %c0_2] : memref<32x32xf32, #tpu.memory_space<vmem>>, vector<32x32xf32>
    %cst = arith.constant dense<0.000000e+00> : vector<16x32xf32>
    %2 = tpu.matmul %0, %1, %cst {dimension_numbers = #tpu.dot_dimension_numbers<[1], [0], [0], [1], [0, 0, 1, 1], [], []>} : vector<16x32xf32>, vector<32x32xf32>, vector<16x32xf32> -> vector<16x32xf32>
    %c0_3 = arith.constant 0 : index
    %c0_4 = arith.constant 0 : index
    %3 = vector.load %arg4[%c0_3, %c0_4] : memref<3x32xf32, #tpu.memory_space<vmem>>, vector<1x32xf32>
    %4 = vector.broadcast %3 : vector<1x32xf32> to vector<16x32xf32>
    %5 = arith.addf %2, %4 : vector<16x32xf32>
    %c0_5 = arith.constant 0 : index
    %c0_6 = arith.constant 0 : index
    %6 = vector.load %arg2[%c0_5, %c0_6] : memref<16x32xf32, #tpu.memory_space<vmem>>, vector<16x32xf32>
    %7 = arith.addf %5, %6 : vector<16x32xf32>
    %cst_7 = arith.constant dense<0.000000e+00> : vector<16xf32>
    %8 = vector.multi_reduction <add>, %7, %cst_7 [1] : vector<16x32xf32> to vector<16xf32>
    %9 = vector.shape_cast %8 : vector<16xf32> to vector<16x1xf32>
    %cst_8 = arith.constant 3.200000e+01 : f32
    %10 = vector.broadcast %cst_8 : f32 to vector<16x1xf32>
    %11 = arith.divf %9, %10 : vector<16x1xf32>
    %12 = vector.broadcast %11 : vector<16x1xf32> to vector<16x32xf32>
    %13 = arith.subf %7, %12 : vector<16x32xf32>
    %14 = arith.mulf %13, %13 : vector<16x32xf32>
    %cst_9 = arith.constant dense<0.000000e+00> : vector<16xf32>
    %15 = vector.multi_reduction <add>, %14, %cst_9 [1] : vector<16x32xf32> to vector<16xf32>
    %16 = vector.shape_cast %15 : vector<16xf32> to vector<16x1xf32>
    %cst_10 = arith.constant 3.200000e+01 : f32
    %17 = vector.broadcast %cst_10 : f32 to vector<16x1xf32>
    %18 = arith.divf %16, %17 : vector<16x1xf32>
    %cst_11 = arith.constant 9.99999996E-13 : f32
    %19 = vector.broadcast %cst_11 : f32 to vector<16x1xf32>
    %20 = arith.addf %18, %19 : vector<16x1xf32>
    %21 = math.rsqrt %20 : vector<16x1xf32>
    %c1 = arith.constant 1 : index
    %c0_12 = arith.constant 0 : index
    %22 = vector.load %arg4[%c1, %c0_12] : memref<3x32xf32, #tpu.memory_space<vmem>>, vector<1x32xf32>
    %23 = vector.broadcast %21 : vector<16x1xf32> to vector<16x32xf32>
    %24 = arith.mulf %13, %23 : vector<16x32xf32>
    %25 = vector.broadcast %22 : vector<1x32xf32> to vector<16x32xf32>
    %26 = arith.mulf %25, %24 : vector<16x32xf32>
    %c2 = arith.constant 2 : index
    %c0_13 = arith.constant 0 : index
    %27 = vector.load %arg4[%c2, %c0_13] : memref<3x32xf32, #tpu.memory_space<vmem>>, vector<1x32xf32>
    %28 = vector.broadcast %27 : vector<1x32xf32> to vector<16x32xf32>
    %29 = arith.addf %26, %28 : vector<16x32xf32>
    %c0_14 = arith.constant 0 : index
    %c0_15 = arith.constant 0 : index
    %30 = vector.load %arg5[%c0_14, %c0_15] : memref<16x32xf32, #tpu.memory_space<vmem>>, vector<16x32xf32>
    tpu.vector_store %arg5[%c0_14, %c0_15], %29 {strides = array<i32>} : memref<16x32xf32, #tpu.memory_space<vmem>>, vector<16x32xf32>,
    return
  }
  func.func @transform_0(%arg0: i32) -> (i32, i32) {
    %c0_i32 = arith.constant 0 : i32
    %c0_i32_0 = arith.constant 0 : i32
    return %arg0, %c0_i32 : i32, i32
  }
  func.func @transform_1(%arg0: i32) -> (i32, i32) {
    %c0_i32 = arith.constant 0 : i32
    %c0_i32_0 = arith.constant 0 : i32
    return %arg0, %c0_i32 : i32, i32
  }
  func.func @transform_2(%arg0: i32) -> (i32, i32) {
    %c0_i32 = arith.constant 0 : i32
    %c0_i32_0 = arith.constant 0 : i32
    %c0_i32_1 = arith.constant 0 : i32
    return %c0_i32, %c0_i32_0 : i32, i32
  }
  func.func @transform_3(%arg0: i32) -> (i32, i32) {
    %c0_i32 = arith.constant 0 : i32
    %c0_i32_0 = arith.constant 0 : i32
    %c0_i32_1 = arith.constant 0 : i32
    return %c0_i32, %c0_i32_0 : i32, i32
  }
  func.func @transform_4(%arg0: i32) -> (i32, i32) {
    %c0_i32 = arith.constant 0 : i32
    %c0_i32_0 = arith.constant 0 : i32
    return %arg0, %c0_i32 : i32, i32
  }
}

module attributes {stable_mosaic.version = 11 : i64} {
  func.func @_self_output_kernel(%arg0: i32, %arg1: memref<16x32xf32, #tpu.memory_space<vmem>>, %arg2: memref<16x32xf32, #tpu.memory_space<vmem>>, %arg3: memref<32x32xf32, #tpu.memory_space<vmem>>, %arg4: memref<3x32xf32, #tpu.memory_space<vmem>>, %arg5: memref<16x32xf32, #tpu.memory_space<vmem>>) attributes {dimension_semantics = [#tpu.dimension_semantics<parallel>], iteration_bounds = array<i64: 1>, scalar_prefetch = 0 : i64, scratch_operands = 0 : i64, tpu.core_type = #tpu.core_type<tc>, window_params = [{transform_indices = @transform_0, window_bounds = array<i64: 16, 32>}, {transform_indices = @transform_1, window_bounds = array<i64: 16, 32>}, {pipeline_mode = #tpu.pipeline_mode<synchronous>, transform_indices = @transform_2, window_bounds = array<i64: 32, 32>}, {pipeline_mode = #tpu.pipeline_mode<synchronous>, transform_indices = @transform_3, window_bounds = array<i64: 3, 32>}, {transform_indices = @transform_4, window_bounds = array<i64: 16, 32>}]} {
    %c0 = arith.constant 0 : index
    %c0_0 = arith.constant 0 : index
    %0 = vector.load %arg1[%c0, %c0_0] : memref<16x32xf32, #tpu.memory_space<vmem>>, vector<16x32xf32>
    %c0_1 = arith.constant 0 : index
    %c0_2 = arith.constant 0 : index
    %1 = vector.load %arg3[%c0_1, %c0_2] : memref<32x32xf32, #tpu.memory_space<vmem>>, vector<32x32xf32>
    %cst = arith.constant dense<0.000000e+00> : vector<16x32xf32>
    %2 = tpu.matmul %0, %1, %cst {dimension_numbers = #tpu.dot_dimension_numbers<[1], [0], [0], [1], [0, 0, 1, 1], [], []>} : vector<16x32xf32>, vector<32x32xf32>, vector<16x32xf32> -> vector<16x32xf32>
    %c0_3 = arith.constant 0 : index
    %c0_4 = arith.constant 0 : index
    %3 = vector.load %arg4[%c0_3, %c0_4] : memref<3x32xf32, #tpu.memory_space<vmem>>, vector<1x32xf32>
    %4 = vector.broadcast %3 : vector<1x32xf32> to vector<16x32xf32>
    %5 = arith.addf %2, %4 : vector<16x32xf32>
    %c0_5 = arith.constant 0 : index
    %c0_6 = arith.constant 0 : index
    %6 = vector.load %arg2[%c0_5, %c0_6] : memref<16x32xf32, #tpu.memory_space<vmem>>, vector<16x32xf32>
    %7 = arith.addf %5, %6 : vector<16x32xf32>
    %cst_7 = arith.constant dense<0.000000e+00> : vector<16xf32>
    %8 = vector.multi_reduction <add>, %7, %cst_7 [1] : vector<16x32xf32> to vector<16xf32>
    %9 = vector.shape_cast %8 : vector<16xf32> to vector<16x1xf32>
    %cst_8 = arith.constant 3.200000e+01 : f32
    %10 = vector.broadcast %cst_8 : f32 to vector<16x1xf32>
    %11 = arith.divf %9, %10 : vector<16x1xf32>
    %12 = vector.broadcast %11 : vector<16x1xf32> to vector<16x32xf32>
    %13 = arith.subf %7, %12 : vector<16x32xf32>
    %14 = arith.mulf %13, %13 : vector<16x32xf32>
    %cst_9 = arith.constant dense<0.000000e+00> : vector<16xf32>
    %15 = vector.multi_reduction <add>, %14, %cst_9 [1] : vector<16x32xf32> to vector<16xf32>
    %16 = vector.shape_cast %15 : vector<16xf32> to vector<16x1xf32>
    %cst_10 = arith.constant 3.200000e+01 : f32
    %17 = vector.broadcast %cst_10 : f32 to vector<16x1xf32>
    %18 = arith.divf %16, %17 : vector<16x1xf32>
    %cst_11 = arith.constant 9.99999996E-13 : f32
    %19 = vector.broadcast %cst_11 : f32 to vector<16x1xf32>
    %20 = arith.addf %18, %19 : vector<16x1xf32>
    %21 = math.rsqrt %20 : vector<16x1xf32>
    %c1 = arith.constant 1 : index
    %c0_12 = arith.constant 0 : index
    %22 = vector.load %arg4[%c1, %c0_12] : memref<3x32xf32, #tpu.memory_space<vmem>>, vector<1x32xf32>
    %23 = vector.broadcast %21 : vector<16x1xf32> to vector<16x32xf32>
    %24 = arith.mulf %13, %23 : vector<16x32xf32>
    %25 = vector.broadcast %22 : vector<1x32xf32> to vector<16x32xf32>
    %26 = arith.mulf %25, %24 : vector<16x32xf32>
    %c2 = arith.constant 2 : index
    %c0_13 = arith.constant 0 : index
    %27 = vector.load %arg4[%c2, %c0_13] : memref<3x32xf32, #tpu.memory_space<vmem>>, vector<1x32xf32>
    %28 = vector.broadcast %27 : vector<1x32xf32> to vector<16x32xf32>
    %29 = arith.addf %26, %28 : vector<16x32xf32>
    %c0_14 = arith.constant 0 : index
    %c0_15 = arith.constant 0 : index
    %30 = vector.load %arg5[%c0_14, %c0_15] : memref<16x32xf32, #tpu.memory_space<vmem>>, vector<16x32xf32>
    tpu.vector_store %arg5[%c0_14, %c0_15], %29 {strides = array<i32>} : memref<16x32xf32, #tpu.memory_space<vmem>>, vector<16x32xf32>,
    return
  }
  func.func @transform_0(%arg0: i32) -> (i32, i32) {
    %c0_i32 = arith.constant 0 : i32
    %c0_i32_0 = arith.constant 0 : i32
    return %arg0, %c0_i32 : i32, i32
  }
  func.func @transform_1(%arg0: i32) -> (i32, i32) {
    %c0_i32 = arith.constant 0 : i32
    %c0_i32_0 = arith.constant 0 : i32
    return %arg0, %c0_i32 : i32, i32
  }
  func.func @transform_2(%arg0: i32) -> (i32, i32) {
    %c0_i32 = arith.constant 0 : i32
    %c0_i32_0 = arith.constant 0 : i32
    %c0_i32_1 = arith.constant 0 : i32
    return %c0_i32, %c0_i32_0 : i32, i32
  }
  func.func @transform_3(%arg0: i32) -> (i32, i32) {
    %c0_i32 = arith.constant 0 : i32
    %c0_i32_0 = arith.constant 0 : i32
    %c0_i32_1 = arith.constant 0 : i32
    return %c0_i32, %c0_i32_0 : i32, i32
  }
  func.func @transform_4(%arg0: i32) -> (i32, i32) {
    %c0_i32 = arith.constant 0 : i32
    %c0_i32_0 = arith.constant 0 : i32
    return %arg0, %c0_i32 : i32, i32
  }
}

</mosaic_0001>

<llo_original>
// kernel: tpu_custom_call.1
$region0: #{tpu_custom_call.1}
  #allocation0 [shape = 'u32[]', space=smem, size = 0x4, offset = 0x4, fixed_abs, tag = 'smem constant byte address 0x4 - core index']
  #allocation1 [shape = 'u32[144,128]{1,0:T(1,128)}', space=vmem, size = 0x12000, scoped, tag = 'internal scratch']
  %s0 = inlined_call_operand.hbm [shape: f32[16,32], index: 0, kind: input, shape index: {}]
  %s1 = inlined_call_operand.hbm [shape: f32[16,32], index: 1, kind: input, shape index: {}]
  %s2 = inlined_call_operand.hbm [shape: f32[32,32], index: 2, kind: input, shape index: {}]
  %s3 = inlined_call_operand.vmem [shape: f32[3,32], index: 3, kind: input, shape index: {}]
  %s4 = inlined_call_operand.hbm [shape: f32[16,32], index: 4, kind: output, shape index: {}]
  %s5 = sld [smem:[#allocation0]]
  $region38: #{tpu_custom_call.1} parent=0
    _
  %s7 = ssub.s32 1, %s5
  %s8 = scalar_select 0, %s7, %s5
  $region1: #{tpu_custom_call.1} parent=0
    #allocation2 [shape = 'u8[8192]{0}', space=vmem, size = 0x2000, scoped, tag = 'input window, operand 0, single buffered']
    #allocation3 [shape = 's32[1]{0}', space=sflag, size = 0x4, scoped, tag = 'scoped memory for tpu_custom_call.1']
    #allocation4 [shape = 's32[1]{0}', space=sflag, size = 0x4, scoped, tag = 'scoped memory for tpu_custom_call.1']
    #allocation5 [shape = 'u8[8192]{0}', space=vmem, size = 0x2000, scoped, tag = 'input window, operand 1, single buffered']
    #allocation6 [shape = 's32[1]{0}', space=sflag, size = 0x4, scoped, tag = 'scoped memory for tpu_custom_call.1']
    #allocation7 [shape = 'u8[16384]{0}', space=vmem, size = 0x4000, scoped, tag = 'input window, operand 2, single buffered']
    #allocation8 [shape = 'u8[8192]{0}', space=vmem, size = 0x2000, scoped, tag = 'output window, operand 0, single buffered']
    %9 = vsyncpa [#allocation3], 0
    %10 = vsyncpa [#allocation6], 0
    %11 = vsyncpa [#allocation4], 0
    // Predicated region
    $region2: #{tpu_custom_call.1} parent=1 // pred_check
      _
    $region3: #{tpu_custom_call.1} parent=1 // pred_check_branch
      %13 = sbr.rel (0) target = $region5
    $region4: #{tpu_custom_call.1} parent=1 // pred_region
      %s15 = ssub.s32 256, 256
      %16 = vsyncadd [#allocation3], %s15
      %s17 = sshll.u32 [#allocation2], 4
      %s18 = int_to_ptr.vmem [resolvable:$true] %s17
      %23 = dma.hbm_to_vmem [thread:$0]  %s0, 256, %s18, [#allocation3], 128, 128, 8
    $region5: #{tpu_custom_call.1} parent=1 // pred_fallthru
      _
    // Predicated region
    $region6: #{tpu_custom_call.1} parent=1 // pred_check
      _
    $region7: #{tpu_custom_call.1} parent=1 // pred_check_branch
      %25 = sbr.rel (0) target = $region9
    $region8: #{tpu_custom_call.1} parent=1 // pred_region
      %s27 = ssub.s32 256, 256
      %28 = vsyncadd [#allocation6], %s27
      %s29 = sshll.u32 [#allocation5], 4
      %s30 = int_to_ptr.vmem [resolvable:$true] %s29
      %35 = dma.hbm_to_vmem [thread:$0]  %s1, 256, %s30, [#allocation6], 128, 128, 8
    $region9: #{tpu_custom_call.1} parent=1 // pred_fallthru
      _
    // Predicated region
    $region10: #{tpu_custom_call.1} parent=1 // pred_check
      _
    $region11: #{tpu_custom_call.1} parent=1 // pred_check_branch
      %37 = sbr.rel (0) target = $region13
    $region12: #{tpu_custom_call.1} parent=1 // pred_region
      %s39 = ssub.s32 512, 512
      %40 = vsyncadd [#allocation6], %s39
      %s41 = sshll.u32 [#allocation7], 4
      %s42 = int_to_ptr.vmem [resolvable:$true] %s41
      %47 = dma.hbm_to_vmem [thread:$0]  %s2, 512, %s42, [#allocation6], 128, 128, 8
    $region13: #{tpu_custom_call.1} parent=1 // pred_fallthru
      _
    // Predicated region
    $region14: #{tpu_custom_call.1} parent=1 // pred_check
      _
    $region15: #{tpu_custom_call.1} parent=1 // pred_check_branch
      %49 = sbr.rel (0) target = $region17
    $region16: #{tpu_custom_call.1} parent=1 // pred_region
      _
    $region17: #{tpu_custom_call.1} parent=1 // pred_fallthru
      _
    // Predicated region
    $region18: #{tpu_custom_call.1} parent=1 // pred_check
      _
    $region19: #{tpu_custom_call.1} parent=1 // pred_check_branch
      %51 = sbr.rel (0) target = $region21
    $region20: #{tpu_custom_call.1} parent=1 // pred_region
      %52 = dma.done [#allocation3], 256
    $region21: #{tpu_custom_call.1} parent=1 // pred_fallthru
      _
    // Predicated region
    $region22: #{tpu_custom_call.1} parent=1 // pred_check
      _
    $region23: #{tpu_custom_call.1} parent=1 // pred_check_branch
      %54 = sbr.rel (0) target = $region25
    $region24: #{tpu_custom_call.1} parent=1 // pred_region
      %55 = dma.done [#allocation6], 256
    $region25: #{tpu_custom_call.1} parent=1 // pred_fallthru
      _
    // Predicated region
    $region26: #{tpu_custom_call.1} parent=1 // pred_check
      _
    $region27: #{tpu_custom_call.1} parent=1 // pred_check_branch
      %57 = sbr.rel (0) target = $region29
    $region28: #{tpu_custom_call.1} parent=1 // pred_region
      %58 = dma.done [#allocation6], 512
    $region29: #{tpu_custom_call.1} parent=1 // pred_fallthru
      _
    %v59 = vld [vmem:[#allocation2] sm:$0xff]
    %v60 = vld [vmem:[#allocation2 + $0x8] sm:$0xff]
    %v61 = vld [vmem:[#allocation7] sm:$0xff]
    %v62 = vld [vmem:[#allocation7 + $0x8] sm:$0xff]
    %v63 = vld [vmem:[#allocation7 + $0x10] sm:$0xff]
    %v64 = vld [vmem:[#allocation7 + $0x18] sm:$0xff]
    %v65 = vld [vmem:[%s3] sm:$0x1]
    %v66 = vlaneseq
    %v67 = vshrl.u32 %v66, 7
    %v68 = vsub.s32 0, %v67
    %v69 = vrot.slane %v65, %v68
    %vm70 = vcmask 261120
    %v72 = vsel %vm70, %v59, 0
    %v75 = vsel %vm70, %v60, 0
    %77 = vmatprep.subr.mxu0 0.0
    %78 = vmatpush1.msra.mxu0 %v61
    %79 = vmatprep.subr.mxu0 0.0
    %80 = vmatpush1.msra.mxu0 %v62
    %81 = vmatprep.subr.mxu0 0.0
    %82 = vmatpush1.msra.mxu0 %v63
    %83 = vmatprep.subr.mxu0 0.0
    %84 = vmatpush1.msra.mxu0 %v64
    %85 = vmatprep.subr.mxu0 0.0
    %86 = vmatpush1.msra.mxu0 0.0
    %87 = vmatprep.subr.mxu0 0.0
    %88 = vmatpush1.msra.mxu0 0.0
    %89 = vmatprep.subr.mxu0 0.0
    %90 = vmatpush1.msra.mxu0 0.0
    %91 = vmatprep.subr.mxu0 0.0
    %92 = vmatpush1.msra.mxu0 0.0
    %93 = vmatprep.subr.mxu0 0.0
    %94 = vmatpush1.msra.mxu0 0.0
    %95 = vmatprep.subr.mxu0 0.0
    %96 = vmatpush1.msra.mxu0 0.0
    %97 = vmatprep.subr.mxu0 0.0
    %98 = vmatpush1.msra.mxu0 0.0
    %99 = vmatprep.subr.mxu0 0.0
    %100 = vmatpush1.msra.mxu0 0.0
    %101 = vmatprep.subr.mxu0 0.0
    %102 = vmatpush1.msra.mxu0 0.0
    %103 = vmatprep.subr.mxu0 0.0
    %104 = vmatpush1.msra.mxu0 0.0
    %105 = vmatprep.subr.mxu0 0.0
    %106 = vmatpush1.msra.mxu0 0.0
    %107 = vmatprep.subr.mxu0 0.0
    %108 = vmatpush1.msra.mxu0 0.0
    %109 = vmatprep.subr.mxu0 0.0
    %110 = vmatpush1.msra.mxu0 0.0
    %111 = vmatprep.subr.mxu0 0.0
    %112 = vmatpush1.msra.mxu0 0.0
    %113 = vmatprep.subr.mxu0 0.0
    %114 = vmatpush1.msra.mxu0 0.0
    %115 = vmatprep.subr.mxu0 0.0
    %116 = vmatpush1.msra.mxu0 0.0
    %117 = vmatprep.subr.mxu0 0.0
    %118 = vmatpush1.msra.mxu0 0.0
    %119 = vmatprep.subr.mxu0 0.0
    %120 = vmatpush1.msra.mxu0 0.0
    %121 = vmatprep.subr.mxu0 0.0
    %122 = vmatpush1.msra.mxu0 0.0
    %123 = vmatprep.subr.mxu0 0.0
    %124 = vmatpush1.msra.mxu0 0.0
    %125 = vmatprep.subr.mxu0 0.0
    %126 = vmatpush1.msra.mxu0 0.0
    %127 = vmatprep.subr.mxu0 0.0
    %128 = vmatpush1.msra.mxu0 0.0
    %129 = vmatprep.subr.mxu0 0.0
    %130 = vmatpush1.msra.mxu0 0.0
    %131 = vmatprep.subr.mxu0 0.0
    %132 = vmatpush1.msra.mxu0 0.0
    %133 = vmatprep.subr.mxu0 0.0
    %134 = vmatpush1.msra.mxu0 0.0
    %135 = vmatprep.subr.mxu0 0.0
    %136 = vmatpush1.msra.mxu0 0.0
    %137 = vmatprep.subr.mxu0 0.0
    %138 = vmatpush1.msra.mxu0 0.0
    %139 = vmatprep.subr.mxu0 0.0
    %140 = vmatpush1.msra.mxu0 0.0
    %141 = vmatprep.mubr.f32.mxu0 0.0
    %142 = vmatmul.mubr.f32.gmra.mrb[0].mxu0 %v72
    %v143 = vpop.f32.mrb[0].mxu0
    %v144 = vadd.f32 %v69, %v143
    %v145 = vpop.f32.mrb[0].mxu0
    %146 = vmatprep.mubr.f32.mxu0 0.0
    %147 = vmatmul.mubr.f32.gmra.mrb[0].mxu0 %v75
    %v148 = vpop.f32.mrb[0].mxu0
    %v149 = vadd.f32 %v69, %v148
    %v150 = vpop.f32.mrb[0].mxu0
    %151 = vdwg.mxu0
    %v152 = vld [vmem:[#allocation5] sm:$0xff]
    %v153 = vld [vmem:[#allocation5 + $0x8] sm:$0xff]
    %v154 = vadd.f32 %v144, %v152
    %v155 = vadd.f32 %v149, %v153
    %v156 = vsel %vm70, %v154, 0.0
    %157 = vadd.xlane.f32.xlu0 %v156
    %v158 = vpop.xlane.xlu0 %157
    %v159 = vsel %vm70, %v155, 0.0
    %160 = vadd.xlane.f32.xlu0 %v159
    %v161 = vpop.xlane.xlu0 %160
    %v162 = vrcp.pop 32.0
    %v163 = vmul.f32 %v158, %v162
    %v164 = vmul.f32 %v161, %v162
    %v165 = vsub.f32 %v154, %v163
    %v166 = vsub.f32 %v155, %v164
    %v167 = vmul.f32 %v165, %v165
    %v168 = vmul.f32 %v166, %v166
    %v169 = vsel %vm70, %v167, 0.0
    %170 = vadd.xlane.f32.xlu0 %v169
    %v171 = vpop.xlane.xlu0 %170
    %v172 = vsel %vm70, %v168, 0.0
    %173 = vadd.xlane.f32.xlu0 %v172
    %v174 = vpop.xlane.xlu0 %173
    %v175 = vmul.f32 %v171, %v162
    %v176 = vmul.f32 %v174, %v162
    %v177 = vadd.f32 %v175, 1e-12
    %v178 = vadd.f32 %v176, 1e-12
    %v179 = vrsqrt.pop %v177
    %v180 = vrsqrt.pop %v178
    %v181 = vld [vmem:[%s3 + $0x1] sm:$0x1]
    %v182 = vmul.f32 %v165, %v179
    %v183 = vmul.f32 %v166, %v180
    %v184 = vlaneseq
    %v185 = vshrl.u32 %v184, 7
    %v186 = vsub.s32 0, %v185
    %v187 = vrot.slane %v181, %v186
    %v188 = vmul.f32 %v187, %v182
    %v189 = vmul.f32 %v187, %v183
    %v190 = vld [vmem:[%s3 + $0x2] sm:$0x1]
    %v191 = vlaneseq
    %v192 = vshrl.u32 %v191, 7
    %v193 = vsub.s32 0, %v192
    %v194 = vrot.slane %v190, %v193
    %v195 = vadd.f32 %v188, %v194
    %v196 = vadd.f32 %v189, %v194
    %197 = vst.msk [vmem:[#allocation8] sm:$0xff] %vm70, %v195
    %198 = vst.msk [vmem:[#allocation8 + $0x8] sm:$0xff] %vm70, %v196
    // Predicated region
    $region30: #{tpu_custom_call.1} parent=1 // pred_check
      _
    $region31: #{tpu_custom_call.1} parent=1 // pred_check_branch
      %200 = sbr.rel (0) target = $region33
    $region32: #{tpu_custom_call.1} parent=1 // pred_region
      %s202 = ssub.s32 256, 256
      %203 = vsyncadd [#allocation4], %s202
      %s204 = sshll.u32 [#allocation8], 4
      %s205 = int_to_ptr.vmem [resolvable:$true] %s204
      %210 = dma.vmem_to_hbm [thread:$0]  %s205, 256, %s4, [#allocation4], 128, 128, 8
    $region33: #{tpu_custom_call.1} parent=1 // pred_fallthru
      _
    // Predicated region
    $region34: #{tpu_custom_call.1} parent=1 // pred_check
      _
    $region35: #{tpu_custom_call.1} parent=1 // pred_check_branch
      %212 = sbr.rel (0) target = $region37
    $region36: #{tpu_custom_call.1} parent=1 // pred_region
      %213 = dma.done [#allocation4], 256
    $region37: #{tpu_custom_call.1} parent=1 // pred_fallthru
      _
    %214 = vsyncpa [#allocation3], 1
    %215 = vsyncpa [#allocation6], 1
    %216 = vsyncpa [#allocation4], 1

// kernel: tpu_custom_call.1
$region0: #{tpu_custom_call.1}
  #allocation0 [shape = 'u32[]', space=smem, size = 0x4, offset = 0x4, fixed_abs, tag = 'smem constant byte address 0x4 - core index']
  #allocation1 [shape = 'u32[144,128]{1,0:T(1,128)}', space=vmem, size = 0x12000, scoped, tag = 'internal scratch']
  %s0 = inlined_call_operand.hbm [shape: f32[16,32], index: 0, kind: input, shape index: {}]
  %s1 = inlined_call_operand.hbm [shape: f32[16,32], index: 1, kind: input, shape index: {}]
  %s2 = inlined_call_operand.hbm [shape: f32[32,32], index: 2, kind: input, shape index: {}]
  %s3 = inlined_call_operand.vmem [shape: f32[3,32], index: 3, kind: input, shape index: {}]
  %s4 = inlined_call_operand.hbm [shape: f32[16,32], index: 4, kind: output, shape index: {}]
  %s5 = sld [smem:[#allocation0]]
  $region38: #{tpu_custom_call.1} parent=0
    _
  %s7 = ssub.s32 1, %s5
  %s8 = scalar_select 0, %s7, %s5
  $region1: #{tpu_custom_call.1} parent=0
    #allocation2 [shape = 'u8[8192]{0}', space=vmem, size = 0x2000, scoped, tag = 'input window, operand 0, single buffered']
    #allocation3 [shape = 's32[1]{0}', space=sflag, size = 0x4, scoped, tag = 'scoped memory for tpu_custom_call.1']
    #allocation4 [shape = 's32[1]{0}', space=sflag, size = 0x4, scoped, tag = 'scoped memory for tpu_custom_call.1']
    #allocation5 [shape = 'u8[8192]{0}', space=vmem, size = 0x2000, scoped, tag = 'input window, operand 1, single buffered']
    #allocation6 [shape = 's32[1]{0}', space=sflag, size = 0x4, scoped, tag = 'scoped memory for tpu_custom_call.1']
    #allocation7 [shape = 'u8[16384]{0}', space=vmem, size = 0x4000, scoped, tag = 'input window, operand 2, single buffered']
    #allocation8 [shape = 'u8[8192]{0}', space=vmem, size = 0x2000, scoped, tag = 'output window, operand 0, single buffered']
    %9 = vsyncpa [#allocation3], 0
    %10 = vsyncpa [#allocation6], 0
    %11 = vsyncpa [#allocation4], 0
    // Predicated region
    $region2: #{tpu_custom_call.1} parent=1 // pred_check
      _
    $region3: #{tpu_custom_call.1} parent=1 // pred_check_branch
      %13 = sbr.rel (0) target = $region5
    $region4: #{tpu_custom_call.1} parent=1 // pred_region
      %s15 = ssub.s32 256, 256
      %16 = vsyncadd [#allocation3], %s15
      %s17 = sshll.u32 [#allocation2], 4
      %s18 = int_to_ptr.vmem [resolvable:$true] %s17
      %23 = dma.hbm_to_vmem [thread:$0]  %s0, 256, %s18, [#allocation3], 128, 128, 8
    $region5: #{tpu_custom_call.1} parent=1 // pred_fallthru
      _
    // Predicated region
    $region6: #{tpu_custom_call.1} parent=1 // pred_check
      _
    $region7: #{tpu_custom_call.1} parent=1 // pred_check_branch
      %25 = sbr.rel (0) target = $region9
    $region8: #{tpu_custom_call.1} parent=1 // pred_region
      %s27 = ssub.s32 256, 256
      %28 = vsyncadd [#allocation6], %s27
      %s29 = sshll.u32 [#allocation5], 4
      %s30 = int_to_ptr.vmem [resolvable:$true] %s29
      %35 = dma.hbm_to_vmem [thread:$0]  %s1, 256, %s30, [#allocation6], 128, 128, 8
    $region9: #{tpu_custom_call.1} parent=1 // pred_fallthru
      _
    // Predicated region
    $region10: #{tpu_custom_call.1} parent=1 // pred_check
      _
    $region11: #{tpu_custom_call.1} parent=1 // pred_check_branch
      %37 = sbr.rel (0) target = $region13
    $region12: #{tpu_custom_call.1} parent=1 // pred_region
      %s39 = ssub.s32 512, 512
      %40 = vsyncadd [#allocation6], %s39
      %s41 = sshll.u32 [#allocation7], 4
      %s42 = int_to_ptr.vmem [resolvable:$true] %s41
      %47 = dma.hbm_to_vmem [thread:$0]  %s2, 512, %s42, [#allocation6], 128, 128, 8
    $region13: #{tpu_custom_call.1} parent=1 // pred_fallthru
      _
    // Predicated region
    $region14: #{tpu_custom_call.1} parent=1 // pred_check
      _
    $region15: #{tpu_custom_call.1} parent=1 // pred_check_branch
      %49 = sbr.rel (0) target = $region17
    $region16: #{tpu_custom_call.1} parent=1 // pred_region
      _
    $region17: #{tpu_custom_call.1} parent=1 // pred_fallthru
      _
    // Predicated region
    $region18: #{tpu_custom_call.1} parent=1 // pred_check
      _
    $region19: #{tpu_custom_call.1} parent=1 // pred_check_branch
      %51 = sbr.rel (0) target = $region21
    $region20: #{tpu_custom_call.1} parent=1 // pred_region
      %52 = dma.done [#allocation3], 256
    $region21: #{tpu_custom_call.1} parent=1 // pred_fallthru
      _
    // Predicated region
    $region22: #{tpu_custom_call.1} parent=1 // pred_check
      _
    $region23: #{tpu_custom_call.1} parent=1 // pred_check_branch
      %54 = sbr.rel (0) target = $region25
    $region24: #{tpu_custom_call.1} parent=1 // pred_region
      %55 = dma.done [#allocation6], 256
    $region25: #{tpu_custom_call.1} parent=1 // pred_fallthru
      _
    // Predicated region
    $region26: #{tpu_custom_call.1} parent=1 // pred_check
      _
    $region27: #{tpu_custom_call.1} parent=1 // pred_check_branch
      %57 = sbr.rel (0) target = $region29
    $region28: #{tpu_custom_call.1} parent=1 // pred_region
      %58 = dma.done [#allocation6], 512
    $region29: #{tpu_custom_call.1} parent=1 // pred_fallthru
      _
    %v59 = vld [vmem:[#allocation2] sm:$0xff]
    %v60 = vld [vmem:[#allocation2 + $0x8] sm:$0xff]
    %v61 = vld [vmem:[#allocation7] sm:$0xff]
    %v62 = vld [vmem:[#allocation7 + $0x8] sm:$0xff]
    %v63 = vld [vmem:[#allocation7 + $0x10] sm:$0xff]
    %v64 = vld [vmem:[#allocation7 + $0x18] sm:$0xff]
    %v65 = vld [vmem:[%s3] sm:$0x1]
    %v66 = vlaneseq
    %v67 = vshrl.u32 %v66, 7
    %v68 = vsub.s32 0, %v67
    %v69 = vrot.slane %v65, %v68
    %vm70 = vcmask 261120
    %v72 = vsel %vm70, %v59, 0
    %v75 = vsel %vm70, %v60, 0
    %77 = vmatprep.subr.mxu0 0.0
    %78 = vmatpush1.msra.mxu0 %v61
    %79 = vmatprep.subr.mxu0 0.0
    %80 = vmatpush1.msra.mxu0 %v62
    %81 = vmatprep.subr.mxu0 0.0
    %82 = vmatpush1.msra.mxu0 %v63
    %83 = vmatprep.subr.mxu0 0.0
    %84 = vmatpush1.msra.mxu0 %v64
    %85 = vmatprep.subr.mxu0 0.0
    %86 = vmatpush1.msra.mxu0 0.0
    %87 = vmatprep.subr.mxu0 0.0
    %88 = vmatpush1.msra.mxu0 0.0
    %89 = vmatprep.subr.mxu0 0.0
    %90 = vmatpush1.msra.mxu0 0.0
    %91 = vmatprep.subr.mxu0 0.0
    %92 = vmatpush1.msra.mxu0 0.0
    %93 = vmatprep.subr.mxu0 0.0
    %94 = vmatpush1.msra.mxu0 0.0
    %95 = vmatprep.subr.mxu0 0.0
    %96 = vmatpush1.msra.mxu0 0.0
    %97 = vmatprep.subr.mxu0 0.0
    %98 = vmatpush1.msra.mxu0 0.0
    %99 = vmatprep.subr.mxu0 0.0
    %100 = vmatpush1.msra.mxu0 0.0
    %101 = vmatprep.subr.mxu0 0.0
    %102 = vmatpush1.msra.mxu0 0.0
    %103 = vmatprep.subr.mxu0 0.0
    %104 = vmatpush1.msra.mxu0 0.0
    %105 = vmatprep.subr.mxu0 0.0
    %106 = vmatpush1.msra.mxu0 0.0
    %107 = vmatprep.subr.mxu0 0.0
    %108 = vmatpush1.msra.mxu0 0.0
    %109 = vmatprep.subr.mxu0 0.0
    %110 = vmatpush1.msra.mxu0 0.0
    %111 = vmatprep.subr.mxu0 0.0
    %112 = vmatpush1.msra.mxu0 0.0
    %113 = vmatprep.subr.mxu0 0.0
    %114 = vmatpush1.msra.mxu0 0.0
    %115 = vmatprep.subr.mxu0 0.0
    %116 = vmatpush1.msra.mxu0 0.0
    %117 = vmatprep.subr.mxu0 0.0
    %118 = vmatpush1.msra.mxu0 0.0
    %119 = vmatprep.subr.mxu0 0.0
    %120 = vmatpush1.msra.mxu0 0.0
    %121 = vmatprep.subr.mxu0 0.0
    %122 = vmatpush1.msra.mxu0 0.0
    %123 = vmatprep.subr.mxu0 0.0
    %124 = vmatpush1.msra.mxu0 0.0
    %125 = vmatprep.subr.mxu0 0.0
    %126 = vmatpush1.msra.mxu0 0.0
    %127 = vmatprep.subr.mxu0 0.0
    %128 = vmatpush1.msra.mxu0 0.0
    %129 = vmatprep.subr.mxu0 0.0
    %130 = vmatpush1.msra.mxu0 0.0
    %131 = vmatprep.subr.mxu0 0.0
    %132 = vmatpush1.msra.mxu0 0.0
    %133 = vmatprep.subr.mxu0 0.0
    %134 = vmatpush1.msra.mxu0 0.0
    %135 = vmatprep.subr.mxu0 0.0
    %136 = vmatpush1.msra.mxu0 0.0
    %137 = vmatprep.subr.mxu0 0.0
    %138 = vmatpush1.msra.mxu0 0.0
    %139 = vmatprep.subr.mxu0 0.0
    %140 = vmatpush1.msra.mxu0 0.0
    %141 = vmatprep.mubr.f32.mxu0 0.0
    %142 = vmatmul.mubr.f32.gmra.mrb[0].mxu0 %v72
    %v143 = vpop.f32.mrb[0].mxu0
    %v144 = vadd.f32 %v69, %v143
    %v145 = vpop.f32.mrb[0].mxu0
    %146 = vmatprep.mubr.f32.mxu0 0.0
    %147 = vmatmul.mubr.f32.gmra.mrb[0].mxu0 %v75
    %v148 = vpop.f32.mrb[0].mxu0
    %v149 = vadd.f32 %v69, %v148
    %v150 = vpop.f32.mrb[0].mxu0
    %151 = vdwg.mxu0
    %v152 = vld [vmem:[#allocation5] sm:$0xff]
    %v153 = vld [vmem:[#allocation5 + $0x8] sm:$0xff]
    %v154 = vadd.f32 %v144, %v152
    %v155 = vadd.f32 %v149, %v153
    %v156 = vsel %vm70, %v154, 0.0
    %157 = vadd.xlane.f32.xlu0 %v156
    %v158 = vpop.xlane.xlu0 %157
    %v159 = vsel %vm70, %v155, 0.0
    %160 = vadd.xlane.f32.xlu0 %v159
    %v161 = vpop.xlane.xlu0 %160
    %v162 = vrcp.pop 32.0
    %v163 = vmul.f32 %v158, %v162
    %v164 = vmul.f32 %v161, %v162
    %v165 = vsub.f32 %v154, %v163
    %v166 = vsub.f32 %v155, %v164
    %v167 = vmul.f32 %v165, %v165
    %v168 = vmul.f32 %v166, %v166
    %v169 = vsel %vm70, %v167, 0.0
    %170 = vadd.xlane.f32.xlu0 %v169
    %v171 = vpop.xlane.xlu0 %170
    %v172 = vsel %vm70, %v168, 0.0
    %173 = vadd.xlane.f32.xlu0 %v172
    %v174 = vpop.xlane.xlu0 %173
    %v175 = vmul.f32 %v171, %v162
    %v176 = vmul.f32 %v174, %v162
    %v177 = vadd.f32 %v175, 1e-12
    %v178 = vadd.f32 %v176, 1e-12
    %v179 = vrsqrt.pop %v177
    %v180 = vrsqrt.pop %v178
    %v181 = vld [vmem:[%s3 + $0x1] sm:$0x1]
    %v182 = vmul.f32 %v165, %v179
    %v183 = vmul.f32 %v166, %v180
    %v184 = vlaneseq
    %v185 = vshrl.u32 %v184, 7
    %v186 = vsub.s32 0, %v185
    %v187 = vrot.slane %v181, %v186
    %v188 = vmul.f32 %v187, %v182
    %v189 = vmul.f32 %v187, %v183
    %v190 = vld [vmem:[%s3 + $0x2] sm:$0x1]
    %v191 = vlaneseq
    %v192 = vshrl.u32 %v191, 7
    %v193 = vsub.s32 0, %v192
    %v194 = vrot.slane %v190, %v193
    %v195 = vadd.f32 %v188, %v194
    %v196 = vadd.f32 %v189, %v194
    %197 = vst.msk [vmem:[#allocation8] sm:$0xff] %vm70, %v195
    %198 = vst.msk [vmem:[#allocation8 + $0x8] sm:$0xff] %vm70, %v196
    // Predicated region
    $region30: #{tpu_custom_call.1} parent=1 // pred_check
      _
    $region31: #{tpu_custom_call.1} parent=1 // pred_check_branch
      %200 = sbr.rel (0) target = $region33
    $region32: #{tpu_custom_call.1} parent=1 // pred_region
      %s202 = ssub.s32 256, 256
      %203 = vsyncadd [#allocation4], %s202
      %s204 = sshll.u32 [#allocation8], 4
      %s205 = int_to_ptr.vmem [resolvable:$true] %s204
      %210 = dma.vmem_to_hbm [thread:$0]  %s205, 256, %s4, [#allocation4], 128, 128, 8
    $region33: #{tpu_custom_call.1} parent=1 // pred_fallthru
      _
    // Predicated region
    $region34: #{tpu_custom_call.1} parent=1 // pred_check
      _
    $region35: #{tpu_custom_call.1} parent=1 // pred_check_branch
      %212 = sbr.rel (0) target = $region37
    $region36: #{tpu_custom_call.1} parent=1 // pred_region
      %213 = dma.done [#allocation4], 256
    $region37: #{tpu_custom_call.1} parent=1 // pred_fallthru
      _
    %214 = vsyncpa [#allocation3], 1
    %215 = vsyncpa [#allocation6], 1
    %216 = vsyncpa [#allocation4], 1

</llo_original>
